<compile_context>
chip_gen: v6e
topology: v6e:2x2x1
jax: 0.10.0
libtpu: 0.0.40
codegen_flags: <defaults>
</compile_context>

<pallas_src>
import functools

import jax
import jax.numpy as jnp
from jax import lax
from jax.experimental import pallas as pl
from jax.experimental.pallas import tpu as pltpu


_SUBLANES = {4: 8, 2: 16, 1: 32}   # sublane packing granularity per itemsize


def _round_up(v, m):
    return ((v + m - 1) // m) * m


def _cdiv(a, b):
    return (a + b - 1) // b


def _tpu_budgets():
    """Returns (vmem_limit_bytes, per-x-tile byte budget, preferred batch tile)."""
    gen = 0
    try:
        kind = jax.devices()[0].device_kind.lower()
        for g in (7, 6, 5, 4, 3, 2):
            if "v%d" % g in kind:
                gen = g
                break
    except Exception:
        gen = 0
    if gen in (4, 5, 6):
        # 128 MiB physical VMEM: large scoped limit, ~12 MiB per x buffer.
        return 100 << 20, 12 << 20, (256 if gen == 6 else 128)
    if gen in (2, 3):
        # very old chips: tiny VMEM, stay conservative.
        return 12 << 20, 2 << 20, 128
    # v7x (64 MiB / TC) and unknown chips: conservative budget that fits anywhere.
    return 48 << 20, 6 << 20, 256


def _readout_kernel(x_ref, wt_ref, b_ref, o_ref, acc_ref, *,
                    apply_relu, n_nodes, node_tile, mask_nodes):
    # x_ref : (TB, TN, Din)   current batch-tile / node-tile of x
    # wt_ref: (Din, Dout_p)   full transposed weight (lane-padded)
    # b_ref : (1, Dout_p)     bias (lane-padded)
    # o_ref : (TB, Dout_p)    output tile for the current batch tile
    # acc_ref: (TB, Din) f32  running node-sum (persists across the node axis)
    n_idx = pl.program_id(1)
    last_n = pl.num_programs(1) - 1

    @pl.when(n_idx == 0)
    def _():
        acc_ref[...] = jnp.zeros_like(acc_ref)

    def _accum(masked):
        xv = x_ref[...].astype(jnp.float32)
        if masked:
            # Zero out the out-of-bounds node rows of the ragged last tile.
            node_ids = node_tile * n_idx + lax.broadcasted_iota(
                jnp.int32, xv.shape, 1)
            xv = jnp.where(node_ids < n_nodes, xv, 0.0)
        acc_ref[...] += jnp.sum(xv, axis=1)

    if mask_nodes:
        # Keep the hot loop mask-free; only the final (ragged) node tile pays.
        @pl.when(n_idx != last_n)
        def _():
            _accum(False)

        @pl.when(n_idx == last_n)
        def _():
            _accum(True)
    else:
        _accum(False)

    @pl.when(n_idx == last_n)
    def _():
        out = jnp.dot(acc_ref[...], wt_ref[...].astype(jnp.float32),
                      preferred_element_type=jnp.float32)       # (TB, Dout_p)
        out = out + jnp.float32(n_nodes) * b_ref[...].astype(jnp.float32)
        if apply_relu:
            out = jnp.maximum(out, 0.0)
        o_ref[...] = out.astype(o_ref.dtype)


def readout_forward(x, weight, bias, act=None, *, tb=None, tn=None):
    """Pallas ReadOut forward.

    x      : (B, N, in_dim)
    weight : (out_dim, in_dim)   (PyTorch nn.Linear layout)
    bias   : (out_dim,)
    act    : None or "relu"
    returns: (B, out_dim)
    """
    # TODO(synk): the PyTorch module accepts any activation callable; only
    # None / ReLU are implemented here.
    if act not in (None, "relu"):
        raise ValueError("only act=None or act='relu' is supported")

    B, N, Din = x.shape
    Dout = weight.shape[0]

    itemsize = jnp.dtype(x.dtype).itemsize
    sub = _SUBLANES.get(itemsize, 8)
    w_itemsize = jnp.dtype(weight.dtype).itemsize
    w_sub = _SUBLANES.get(w_itemsize, 8)

    Din_lanes = _round_up(Din, 128)
    row_bytes = Din_lanes * itemsize              # one (batch, node) row in VMEM
    Dout_p = _round_up(max(Dout, 128), 128)       # lane-dense output / weight

    vmem_limit, x_tile_budget, tb_pref = _tpu_budgets()

    # ---- batch tile --------------------------------------------------------
    user_tb = tb is not None
    if tb is None:
        if B <= sub:
            tb = B                    # block dim == full dim is always legal
        else:
            # Balanced >=2 batch blocks so megacore / both v7x TCs get work.
            tb = max(sub, min(tb_pref, _round_up(_cdiv(B, 2), sub)))

    # ---- node tile under an explicit per-generation VMEM budget -----------
    def _fixed_bytes(tb_):
        # Conservative: assume weight/bias fall back to double-buffering.
        wb = 2 * _round_up(Din, w_sub) * Dout_p * w_itemsize
        bb = 2 * w_sub * Dout_p * w_itemsize
        ob = 2 * _round_up(max(tb_, 1), 8) * Dout_p * itemsize
        ab = _round_up(max(tb_, 1), 8) * Din_lanes * 4          # f32 accumulator
        return wb + bb + ob + ab

    margin = 2 << 20
    while True:
        avail = vmem_limit - _fixed_bytes(tb) - margin
        per_x_buf = min(x_tile_budget, max(0, avail) // 2)      # x double-buffered
        max_tn = per_x_buf // max(1, tb * row_bytes)
        if (user_tb or tn is not None or max_tn >= min(N, sub)
                or tb <= sub or tb == B):
            break
        # Din too large for this tb: shrink the batch tile, not the node tile.
        tb = max(sub, (tb // 2) // sub * sub)

    if tn is None:
        tn = int(min(N, max(1, max_tn)))
        if tn < N:
            tn = max(sub, (tn // sub) * sub)     # dtype-aware sublane rounding

    mask_nodes = (N % tn) != 0

    # ---- weight / bias (small; lane-pad to Dout_p with zeros) --------------
    wt = weight.T                                 # (Din, Dout)
    b2 = bias.reshape(1, Dout)
    if Dout_p != Dout:
        wt = jnp.pad(wt, ((0, 0), (0, Dout_p - Dout)))
        b2 = jnp.pad(b2, ((0, 0), (0, Dout_p - Dout)))

    kernel = functools.partial(
        _readout_kernel,
        apply_relu=(act == "relu"),
        n_nodes=N,
        node_tile=tn,
        mask_nodes=mask_nodes,
    )

    grid = (_cdiv(B, tb), _cdiv(N, tn))
    buffered_cls = getattr(pl, "Buffered", None)

    def _call(single_buffer_consts):
        const_kwargs = {}
        if single_buffer_consts and buffered_cls is not None:
            # Weight/bias index_map is constant -> one fetch is enough; save
            # a full extra weight copy of VMEM.
            const_kwargs = {"pipeline_mode": buffered_cls(1)}
        grid_spec = pltpu.PrefetchScalarGridSpec(
            num_scalar_prefetch=0,
            grid=grid,
            in_specs=[
                pl.BlockSpec((tb, tn, Din), lambda b, n: (b, n, 0)),
                pl.BlockSpec((Din, Dout_p), lambda b, n: (0, 0), **const_kwargs),
                pl.BlockSpec((1, Dout_p), lambda b, n: (0, 0), **const_kwargs),
            ],
            out_specs=pl.BlockSpec((tb, Dout_p), lambda b, n: (b, 0)),
            scratch_shapes=[pltpu.VMEM((tb, Din), jnp.float32)],
        )
        return pl.pallas_call(
            kernel,
            out_shape=jax.ShapeDtypeStruct((B, Dout_p), x.dtype),
            grid_spec=grid_spec,
            compiler_params=pltpu.CompilerParams(
                dimension_semantics=("parallel", "arbitrary"),
                vmem_limit_bytes=int(vmem_limit)),
        )(x, wt, b2)

    try:
        out_p = _call(True)
        out_p.block_until_ready()   # surface any single-buffer lowering issue
    except Exception:
        # pl.Buffered(1) not supported by this jax/Mosaic build: plain specs.
        out_p = _call(False)

    return out_p[:, :Dout]


if __name__ == "__main__":
    key = jax.random.PRNGKey(0)
    kx, kw, kb, kx2 = jax.random.split(key, 4)

    # Small shapes consistent with the module: batch=2, nodes=8, in=32, out=16.
    B, N, in_dim, out_dim = 2, 8, 32, 16

    x = jax.random.normal(kx, (B, N, in_dim), dtype=jnp.float32)
    # nn.init.xavier_uniform_ (gain=1): U(-a, a), a = sqrt(6 / (fan_in+fan_out))
    limit = (6.0 / (in_dim + out_dim)) ** 0.5
    weight = jax.random.uniform(kw, (out_dim, in_dim), dtype=jnp.float32,
                                minval=-limit, maxval=limit)
    # nn.Linear default bias init: U(-1/sqrt(fan_in), 1/sqrt(fan_in))
    bb = 1.0 / (in_dim ** 0.5)
    bias = jax.random.uniform(kb, (out_dim,), dtype=jnp.float32,
                              minval=-bb, maxval=bb)

    def ref_fn(xv, relu=False):
        r = jnp.sum(jnp.einsum("bnd,od->bno", xv, weight) + bias, axis=1)
        return jnp.maximum(r, 0.0) if relu else r

    # act=None path (module constructed with act=None)
    out = jax.block_until_ready(readout_forward(x, weight, bias, act=None))
    assert out.shape == (B, out_dim)
    assert jnp.allclose(out, ref_fn(x), atol=1e-4, rtol=1e-4)

    # activation path
    out_relu = jax.block_until_ready(readout_forward(x, weight, bias, act="relu"))
    assert jnp.allclose(out_relu, ref_fn(x, relu=True), atol=1e-4, rtol=1e-4)

    # ragged batch / node tails: exercises the in-kernel node mask and partial
    # edge blocks (no wrapper-side jnp.pad of x).
    B2, N2 = 10, 13
    x2 = jax.random.normal(kx2, (B2, N2, in_dim), dtype=jnp.float32)
    out2 = jax.block_until_ready(
        readout_forward(x2, weight, bias, act=None, tb=8, tn=8))
    assert out2.shape == (B2, out_dim)
    assert jnp.allclose(out2, ref_fn(x2), atol=1e-4, rtol=1e-4)

    print("KERNEL_OK")
</pallas_src>

<mosaic_0001>
module attributes {stable_mosaic.version = 11 : i64} {
  func.func @_readout_kernel(%arg0: i32, %arg1: i32, %arg2: memref<2x8x32xf32, #tpu.memory_space<vmem>>, %arg3: memref<32x128xf32, #tpu.memory_space<vmem>>, %arg4: memref<1x128xf32, #tpu.memory_space<vmem>>, %arg5: memref<2x128xf32, #tpu.memory_space<vmem>>, %arg6: memref<2x32xf32, #tpu.memory_space<vmem>>) attributes {dimension_semantics = [#tpu.dimension_semantics<parallel>, #tpu.dimension_semantics<arbitrary>], iteration_bounds = array<i64: 1, 1>, scalar_prefetch = 0 : i64, scratch_operands = 1 : i64, tpu.core_type = #tpu.core_type<tc>, window_params = [{transform_indices = @transform_0, window_bounds = array<i64: 2, 8, 32>}, {pipeline_mode = #tpu.pipeline_mode<synchronous>, transform_indices = @transform_1, window_bounds = array<i64: 32, 128>}, {pipeline_mode = #tpu.pipeline_mode<synchronous>, transform_indices = @transform_2, window_bounds = array<i64: 1, 128>}, {transform_indices = @transform_3, window_bounds = array<i64: 2, 128>}]} {
    %c0_i32 = arith.constant 0 : i32
    %0 = arith.cmpi eq, %arg1, %c0_i32 : i32
    %1 = arith.extui %0 : i1 to i32
    %c0_i32_0 = arith.constant 0 : i32
    %2 = arith.cmpi ne, %1, %c0_i32_0 : i32
    scf.if %2 {
      %cst_9 = arith.constant 0.000000e+00 : f32
      %11 = vector.broadcast %cst_9 : f32 to vector<2x32xf32>
      %c0_10 = arith.constant 0 : index
      %c0_11 = arith.constant 0 : index
      %12 = vector.load %arg6[%c0_10, %c0_11] : memref<2x32xf32, #tpu.memory_space<vmem>>, vector<2x32xf32>
      tpu.vector_store %arg6[%c0_10, %c0_11], %11 {strides = array<i32>} : memref<2x32xf32, #tpu.memory_space<vmem>>, vector<2x32xf32>,
    } else {
    }
    %c0 = arith.constant 0 : index
    %c0_1 = arith.constant 0 : index
    %c0_2 = arith.constant 0 : index
    %3 = vector.load %arg2[%c0, %c0_1, %c0_2] : memref<2x8x32xf32, #tpu.memory_space<vmem>>, vector<2x8x32xf32>
    %c0_3 = arith.constant 0 : index
    %c0_4 = arith.constant 0 : index
    %4 = vector.load %arg6[%c0_3, %c0_4] : memref<2x32xf32, #tpu.memory_space<vmem>>, vector<2x32xf32>
    %cst = arith.constant dense<0.000000e+00> : vector<2x32xf32>
    %5 = vector.multi_reduction <add>, %3, %cst [1] : vector<2x8x32xf32> to vector<2x32xf32>
    %6 = arith.addf %4, %5 : vector<2x32xf32>
    %c0_5 = arith.constant 0 : index
    %c0_6 = arith.constant 0 : index
    %7 = vector.load %arg6[%c0_5, %c0_6] : memref<2x32xf32, #tpu.memory_space<vmem>>, vector<2x32xf32>
    tpu.vector_store %arg6[%c0_5, %c0_6], %6 {strides = array<i32>} : memref<2x32xf32, #tpu.memory_space<vmem>>, vector<2x32xf32>,
    %c0_i32_7 = arith.constant 0 : i32
    %8 = arith.cmpi eq, %arg1, %c0_i32_7 : i32
    %9 = arith.extui %8 : i1 to i32
    %c0_i32_8 = arith.constant 0 : i32
    %10 = arith.cmpi ne, %9, %c0_i32_8 : i32
    scf.if %10 {
      %c0_9 = arith.constant 0 : index
      %c0_10 = arith.constant 0 : index
      %11 = vector.load %arg6[%c0_9, %c0_10] : memref<2x32xf32, #tpu.memory_space<vmem>>, vector<2x32xf32>
      %c0_11 = arith.constant 0 : index
      %c0_12 = arith.constant 0 : index
      %12 = vector.load %arg3[%c0_11, %c0_12] : memref<32x128xf32, #tpu.memory_space<vmem>>, vector<32x128xf32>
      %cst_13 = arith.constant dense<0.000000e+00> : vector<2x128xf32>
      %13 = tpu.matmul %11, %12, %cst_13 {dimension_numbers = #tpu.dot_dimension_numbers<[1], [0], [0], [1], [0, 0, 1, 1], [], []>} : vector<2x32xf32>, vector<32x128xf32>, vector<2x128xf32> -> vector<2x128xf32>
      %c0_14 = arith.constant 0 : index
      %c0_15 = arith.constant 0 : index
      %14 = vector.load %arg4[%c0_14, %c0_15] : memref<1x128xf32, #tpu.memory_space<vmem>>, vector<1x128xf32>
      %cst_16 = arith.constant 8.000000e+00 : f32
      %15 = vector.broadcast %cst_16 : f32 to vector<1x128xf32>
      %16 = arith.mulf %15, %14 : vector<1x128xf32>
      %17 = vector.broadcast %16 : vector<1x128xf32> to vector<2x128xf32>
      %18 = arith.addf %13, %17 : vector<2x128xf32>
      %c0_17 = arith.constant 0 : index
      %c0_18 = arith.constant 0 : index
      %19 = vector.load %arg5[%c0_17, %c0_18] : memref<2x128xf32, #tpu.memory_space<vmem>>, vector<2x128xf32>
      tpu.vector_store %arg5[%c0_17, %c0_18], %18 {strides = array<i32>} : memref<2x128xf32, #tpu.memory_space<vmem>>, vector<2x128xf32>,
    } else {
    }
    return
  }
  func.func @transform_0(%arg0: i32, %arg1: i32) -> (i32, i32, i32) {
    %c0_i32 = arith.constant 0 : i32
    %c0_i32_0 = arith.constant 0 : i32
    return %arg0, %arg1, %c0_i32 : i32, i32, i32
  }
  func.func @transform_1(%arg0: i32, %arg1: i32) -> (i32, i32) {
    %c0_i32 = arith.constant 0 : i32
    %c0_i32_0 = arith.constant 0 : i32
    %c0_i32_1 = arith.constant 0 : i32
    return %c0_i32, %c0_i32_0 : i32, i32
  }
  func.func @transform_2(%arg0: i32, %arg1: i32) -> (i32, i32) {
    %c0_i32 = arith.constant 0 : i32
    %c0_i32_0 = arith.constant 0 : i32
    %c0_i32_1 = arith.constant 0 : i32
    return %c0_i32, %c0_i32_0 : i32, i32
  }
  func.func @transform_3(%arg0: i32, %arg1: i32) -> (i32, i32) {
    %c0_i32 = arith.constant 0 : i32
    %c0_i32_0 = arith.constant 0 : i32
    return %arg0, %c0_i32 : i32, i32
  }
}

module attributes {stable_mosaic.version = 11 : i64} {
  func.func @_readout_kernel(%arg0: i32, %arg1: i32, %arg2: memref<2x8x32xf32, #tpu.memory_space<vmem>>, %arg3: memref<32x128xf32, #tpu.memory_space<vmem>>, %arg4: memref<1x128xf32, #tpu.memory_space<vmem>>, %arg5: memref<2x128xf32, #tpu.memory_space<vmem>>, %arg6: memref<2x32xf32, #tpu.memory_space<vmem>>) attributes {dimension_semantics = [#tpu.dimension_semantics<parallel>, #tpu.dimension_semantics<arbitrary>], iteration_bounds = array<i64: 1, 1>, scalar_prefetch = 0 : i64, scratch_operands = 1 : i64, tpu.core_type = #tpu.core_type<tc>, window_params = [{transform_indices = @transform_0, window_bounds = array<i64: 2, 8, 32>}, {pipeline_mode = #tpu.pipeline_mode<synchronous>, transform_indices = @transform_1, window_bounds = array<i64: 32, 128>}, {pipeline_mode = #tpu.pipeline_mode<synchronous>, transform_indices = @transform_2, window_bounds = array<i64: 1, 128>}, {transform_indices = @transform_3, window_bounds = array<i64: 2, 128>}]} {
    %c0_i32 = arith.constant 0 : i32
    %0 = arith.cmpi eq, %arg1, %c0_i32 : i32
    %1 = arith.extui %0 : i1 to i32
    %c0_i32_0 = arith.constant 0 : i32
    %2 = arith.cmpi ne, %1, %c0_i32_0 : i32
    scf.if %2 {
      %cst_9 = arith.constant 0.000000e+00 : f32
      %11 = vector.broadcast %cst_9 : f32 to vector<2x32xf32>
      %c0_10 = arith.constant 0 : index
      %c0_11 = arith.constant 0 : index
      %12 = vector.load %arg6[%c0_10, %c0_11] : memref<2x32xf32, #tpu.memory_space<vmem>>, vector<2x32xf32>
      tpu.vector_store %arg6[%c0_10, %c0_11], %11 {strides = array<i32>} : memref<2x32xf32, #tpu.memory_space<vmem>>, vector<2x32xf32>,
    } else {
    }
    %c0 = arith.constant 0 : index
    %c0_1 = arith.constant 0 : index
    %c0_2 = arith.constant 0 : index
    %3 = vector.load %arg2[%c0, %c0_1, %c0_2] : memref<2x8x32xf32, #tpu.memory_space<vmem>>, vector<2x8x32xf32>
    %c0_3 = arith.constant 0 : index
    %c0_4 = arith.constant 0 : index
    %4 = vector.load %arg6[%c0_3, %c0_4] : memref<2x32xf32, #tpu.memory_space<vmem>>, vector<2x32xf32>
    %cst = arith.constant dense<0.000000e+00> : vector<2x32xf32>
    %5 = vector.multi_reduction <add>, %3, %cst [1] : vector<2x8x32xf32> to vector<2x32xf32>
    %6 = arith.addf %4, %5 : vector<2x32xf32>
    %c0_5 = arith.constant 0 : index
    %c0_6 = arith.constant 0 : index
    %7 = vector.load %arg6[%c0_5, %c0_6] : memref<2x32xf32, #tpu.memory_space<vmem>>, vector<2x32xf32>
    tpu.vector_store %arg6[%c0_5, %c0_6], %6 {strides = array<i32>} : memref<2x32xf32, #tpu.memory_space<vmem>>, vector<2x32xf32>,
    %c0_i32_7 = arith.constant 0 : i32
    %8 = arith.cmpi eq, %arg1, %c0_i32_7 : i32
    %9 = arith.extui %8 : i1 to i32
    %c0_i32_8 = arith.constant 0 : i32
    %10 = arith.cmpi ne, %9, %c0_i32_8 : i32
    scf.if %10 {
      %c0_9 = arith.constant 0 : index
      %c0_10 = arith.constant 0 : index
      %11 = vector.load %arg6[%c0_9, %c0_10] : memref<2x32xf32, #tpu.memory_space<vmem>>, vector<2x32xf32>
      %c0_11 = arith.constant 0 : index
      %c0_12 = arith.constant 0 : index
      %12 = vector.load %arg3[%c0_11, %c0_12] : memref<32x128xf32, #tpu.memory_space<vmem>>, vector<32x128xf32>
      %cst_13 = arith.constant dense<0.000000e+00> : vector<2x128xf32>
      %13 = tpu.matmul %11, %12, %cst_13 {dimension_numbers = #tpu.dot_dimension_numbers<[1], [0], [0], [1], [0, 0, 1, 1], [], []>} : vector<2x32xf32>, vector<32x128xf32>, vector<2x128xf32> -> vector<2x128xf32>
      %c0_14 = arith.constant 0 : index
      %c0_15 = arith.constant 0 : index
      %14 = vector.load %arg4[%c0_14, %c0_15] : memref<1x128xf32, #tpu.memory_space<vmem>>, vector<1x128xf32>
      %cst_16 = arith.constant 8.000000e+00 : f32
      %15 = vector.broadcast %cst_16 : f32 to vector<1x128xf32>
      %16 = arith.mulf %15, %14 : vector<1x128xf32>
      %17 = vector.broadcast %16 : vector<1x128xf32> to vector<2x128xf32>
      %18 = arith.addf %13, %17 : vector<2x128xf32>
      %c0_17 = arith.constant 0 : index
      %c0_18 = arith.constant 0 : index
      %19 = vector.load %arg5[%c0_17, %c0_18] : memref<2x128xf32, #tpu.memory_space<vmem>>, vector<2x128xf32>
      tpu.vector_store %arg5[%c0_17, %c0_18], %18 {strides = array<i32>} : memref<2x128xf32, #tpu.memory_space<vmem>>, vector<2x128xf32>,
    } else {
    }
    return
  }
  func.func @transform_0(%arg0: i32, %arg1: i32) -> (i32, i32, i32) {
    %c0_i32 = arith.constant 0 : i32
    %c0_i32_0 = arith.constant 0 : i32
    return %arg0, %arg1, %c0_i32 : i32, i32, i32
  }
  func.func @transform_1(%arg0: i32, %arg1: i32) -> (i32, i32) {
    %c0_i32 = arith.constant 0 : i32
    %c0_i32_0 = arith.constant 0 : i32
    %c0_i32_1 = arith.constant 0 : i32
    return %c0_i32, %c0_i32_0 : i32, i32
  }
  func.func @transform_2(%arg0: i32, %arg1: i32) -> (i32, i32) {
    %c0_i32 = arith.constant 0 : i32
    %c0_i32_0 = arith.constant 0 : i32
    %c0_i32_1 = arith.constant 0 : i32
    return %c0_i32, %c0_i32_0 : i32, i32
  }
  func.func @transform_3(%arg0: i32, %arg1: i32) -> (i32, i32) {
    %c0_i32 = arith.constant 0 : i32
    %c0_i32_0 = arith.constant 0 : i32
    return %arg0, %c0_i32 : i32, i32
  }
}

</mosaic_0001>

<llo_original>
// kernel: tpu_custom_call.1
$region0: #{tpu_custom_call.1}
  #allocation0 [shape = 'u32[]', space=smem, size = 0x4, offset = 0x4, fixed_abs, tag = 'smem constant byte address 0x4 - core index']
  #allocation1 [shape = 'u32[144,128]{1,0:T(1,128)}', space=vmem, size = 0x12000, scoped, tag = 'internal scratch']
  #allocation2 [shape = 'f32[2,32]{1,0:T(2,128)}', space=vmem, size = 0x400, scoped, tag = 'scratch operand']
  %s0 = inlined_call_operand.hbm [shape: f32[2,8,32], index: 0, kind: input, shape index: {}]
  %s1 = inlined_call_operand.hbm [shape: f32[32,128], index: 1, kind: input, shape index: {}]
  %s2 = inlined_call_operand.vmem [shape: f32[1,128], index: 2, kind: input, shape index: {}]
  %s3 = inlined_call_operand.hbm [shape: f32[2,128], index: 3, kind: output, shape index: {}]
  %s4 = sld [smem:[#allocation0]]
  $region38: #{tpu_custom_call.1} parent=0
    _
  %s6 = ssub.s32 1, %s4
  %s7 = scalar_select 0, %s6, %s4
  $region1: #{tpu_custom_call.1} parent=0
    #allocation3 [shape = 'u8[8192]{0}', space=vmem, size = 0x2000, scoped, tag = 'input window, operand 0, single buffered']
    #allocation4 [shape = 's32[1]{0}', space=sflag, size = 0x4, scoped, tag = 'scoped memory for tpu_custom_call.1']
    #allocation5 [shape = 's32[1]{0}', space=sflag, size = 0x4, scoped, tag = 'scoped memory for tpu_custom_call.1']
    #allocation6 [shape = 'u8[16384]{0}', space=vmem, size = 0x4000, scoped, tag = 'input window, operand 1, single buffered']
    #allocation7 [shape = 's32[1]{0}', space=sflag, size = 0x4, scoped, tag = 'scoped memory for tpu_custom_call.1']
    #allocation8 [shape = 'u8[1024]{0}', space=vmem, size = 0x400, scoped, tag = 'output window, operand 0, single buffered']
    %8 = vsyncpa [#allocation4], 0
    %9 = vsyncpa [#allocation7], 0
    %10 = vsyncpa [#allocation5], 0
    // Predicated region
    $region2: #{tpu_custom_call.1} parent=1 // pred_check
      _
    $region3: #{tpu_custom_call.1} parent=1 // pred_check_branch
      %12 = sbr.rel (0) target = $region5
    $region4: #{tpu_custom_call.1} parent=1 // pred_region
      %s14 = ssub.s32 256, 256
      %15 = vsyncadd [#allocation4], %s14
      %s16 = sshll.u32 [#allocation3], 4
      %s17 = int_to_ptr.vmem [resolvable:$true] %s16
      %22 = dma.hbm_to_vmem [thread:$0]  %s0, 256, %s17, [#allocation4], 128, 128, 8
    $region5: #{tpu_custom_call.1} parent=1 // pred_fallthru
      _
    // Predicated region
    $region6: #{tpu_custom_call.1} parent=1 // pred_check
      _
    $region7: #{tpu_custom_call.1} parent=1 // pred_check_branch
      %24 = sbr.rel (0) target = $region9
    $region8: #{tpu_custom_call.1} parent=1 // pred_region
      %s26 = ssub.s32 512, 512
      %27 = vsyncadd [#allocation7], %s26
      %s28 = sshll.u32 [#allocation6], 4
      %s29 = int_to_ptr.vmem [resolvable:$true] %s28
      %34 = dma.hbm_to_vmem [thread:$0]  %s1, 512, %s29, [#allocation7], 128, 128, 8
    $region9: #{tpu_custom_call.1} parent=1 // pred_fallthru
      _
    // Predicated region
    $region10: #{tpu_custom_call.1} parent=1 // pred_check
      _
    $region11: #{tpu_custom_call.1} parent=1 // pred_check_branch
      %36 = sbr.rel (0) target = $region13
    $region12: #{tpu_custom_call.1} parent=1 // pred_region
      _
    $region13: #{tpu_custom_call.1} parent=1 // pred_fallthru
      _
    // Predicated region
    $region14: #{tpu_custom_call.1} parent=1 // pred_check
      _
    $region15: #{tpu_custom_call.1} parent=1 // pred_check_branch
      %38 = sbr.rel (0) target = $region17
    $region16: #{tpu_custom_call.1} parent=1 // pred_region
      %39 = dma.done [#allocation4], 256
    $region17: #{tpu_custom_call.1} parent=1 // pred_fallthru
      _
    // Predicated region
    $region18: #{tpu_custom_call.1} parent=1 // pred_check
      _
    $region19: #{tpu_custom_call.1} parent=1 // pred_check_branch
      %41 = sbr.rel (0) target = $region21
    $region20: #{tpu_custom_call.1} parent=1 // pred_region
      %42 = dma.done [#allocation7], 512
    $region21: #{tpu_custom_call.1} parent=1 // pred_fallthru
      _
    %p43 = scmp.eq.s32.totalorder 0, 0
    // Predicated region
    $region22: #{tpu_custom_call.1} parent=1 // pred_check
      %p44 = pneg %p43
    $region23: #{tpu_custom_call.1} parent=1 // pred_check_branch
      %46 = sbr.rel (%p44) target = $region25
    $region24: #{tpu_custom_call.1} parent=1 // pred_region
      %vm47 = vcmask 254976
      %48 = vst.msk [vmem:[#allocation2] sm:$0x3] %vm47, 0.0
    $region25: #{tpu_custom_call.1} parent=1 // pred_fallthru
      _
    %v49 = vld [vmem:[#allocation3] sm:$0xff]
    %v50 = vld [vmem:[#allocation3 + $0x8] sm:$0xff]
    %v51 = vld [vmem:[#allocation2] sm:$0x3]
    %vm52 = vcmask 261120
    %v53 = vsel %vm52, %v49, 0.0
    %v54 = vrot.slane %v53, 4
    %v55 = vadd.f32 %v53, %v54
    %v56 = vrot.slane %v55, 2
    %v57 = vadd.f32 %v55, %v56
    %v58 = vrot.slane %v57, 1
    %v59 = vadd.f32 %v57, %v58
    %v60 = vsel %vm52, %v50, 0.0
    %v61 = vrot.slane %v60, 4
    %v62 = vadd.f32 %v60, %v61
    %v63 = vrot.slane %v62, 2
    %v64 = vadd.f32 %v62, %v63
    %v65 = vrot.slane %v64, 1
    %v66 = vadd.f32 %v64, %v65
    %vm69 = vcmask 1041409
    %v70 = vsel %vm69, %v66, %v59
    %v72 = vadd.f32 %v51, %v70
    %vm73 = vcmask 254976
    %74 = vst.msk [vmem:[#allocation2] sm:$0x3] %vm73, %v72
    // Predicated region
    $region26: #{tpu_custom_call.1} parent=1 // pred_check
      %p75 = pneg %p43
    $region27: #{tpu_custom_call.1} parent=1 // pred_check_branch
      %77 = sbr.rel (%p75) target = $region29
    $region28: #{tpu_custom_call.1} parent=1 // pred_region
      %v78 = vld [vmem:[#allocation2] sm:$0x3]
      %v79 = vld [vmem:[#allocation6] sm:$0xff]
      %v80 = vld [vmem:[#allocation6 + $0x8] sm:$0xff]
      %v81 = vld [vmem:[#allocation6 + $0x10] sm:$0xff]
      %v82 = vld [vmem:[#allocation6 + $0x18] sm:$0xff]
      %v83 = vld [vmem:[%s2] sm:$0x1]
      %v84 = vmul.f32 %v83, 8.0
      %v86 = vlaneseq
      %v87 = vshrl.u32 %v86, 7
      %v88 = vsub.s32 0, %v87
      %v89 = vrot.slane %v84, %v88
      %v92 = vsel %vm52, %v78, 0
      %94 = vmatprep.subr.mxu0 0.0
      %95 = vmatpush1.msra.mxu0 0.0
      %96 = vmatprep.subr.mxu0 0.0
      %97 = vmatpush1.msra.mxu0 0.0
      %98 = vmatprep.subr.mxu0 0.0
      %99 = vmatpush1.msra.mxu0 0.0
      %100 = vmatprep.subr.mxu0 0.0
      %101 = vmatpush1.msra.mxu0 0.0
      %102 = vmatprep.subr.mxu0 0.0
      %103 = vmatpush1.msra.mxu0 0.0
      %104 = vmatprep.subr.mxu0 0.0
      %105 = vmatpush1.msra.mxu0 0.0
      %106 = vmatprep.subr.mxu0 0.0
      %107 = vmatpush1.msra.mxu0 0.0
      %108 = vmatprep.subr.mxu0 0.0
      %109 = vmatpush1.msra.mxu0 0.0
      %110 = vmatprep.subr.mxu0 0.0
      %111 = vmatpush1.msra.mxu0 0.0
      %112 = vmatprep.subr.mxu0 0.0
      %113 = vmatpush1.msra.mxu0 0.0
      %114 = vmatprep.subr.mxu0 0.0
      %115 = vmatpush1.msra.mxu0 0.0
      %116 = vmatprep.subr.mxu0 0.0
      %117 = vmatpush1.msra.mxu0 0.0
      %118 = vmatprep.subr.mxu0 0.0
      %119 = vmatpush1.msra.mxu0 %v82
      %120 = vmatprep.subr.mxu0 0.0
      %121 = vmatpush1.msra.mxu0 %v81
      %122 = vmatprep.subr.mxu0 0.0
      %123 = vmatpush1.msra.mxu0 %v80
      %124 = vmatprep.subr.mxu0 0.0
      %125 = vmatpush1.msra.mxu0 %v79
      %126 = vmatprep.subr.mxu0 0.0
      %127 = vmatpush2.msra.mxu0 0.0
      %128 = vmatprep.subr.mxu0 0.0
      %129 = vmatpush2.msra.mxu0 0.0
      %130 = vmatprep.subr.mxu0 0.0
      %131 = vmatpush2.msra.mxu0 0.0
      %132 = vmatprep.subr.mxu0 0.0
      %133 = vmatpush2.msra.mxu0 0.0
      %134 = vmatprep.subr.mxu0 0.0
      %135 = vmatpush2.msra.mxu0 0.0
      %136 = vmatprep.subr.mxu0 0.0
      %137 = vmatpush2.msra.mxu0 0.0
      %138 = vmatprep.subr.mxu0 0.0
      %139 = vmatpush2.msra.mxu0 0.0
      %140 = vmatprep.subr.mxu0 0.0
      %141 = vmatpush2.msra.mxu0 0.0
      %142 = vmatprep.subr.mxu0 0.0
      %143 = vmatpush2.msra.mxu0 0.0
      %144 = vmatprep.subr.mxu0 0.0
      %145 = vmatpush2.msra.mxu0 0.0
      %146 = vmatprep.subr.mxu0 0.0
      %147 = vmatpush2.msra.mxu0 0.0
      %148 = vmatprep.subr.mxu0 0.0
      %149 = vmatpush2.msra.mxu0 0.0
      %150 = vmatprep.subr.mxu0 0.0
      %151 = vmatpush2.msra.mxu0 0.0
      %152 = vmatprep.subr.mxu0 0.0
      %153 = vmatpush2.msra.mxu0 0.0
      %154 = vmatprep.subr.mxu0 0.0
      %155 = vmatpush2.msra.mxu0 0.0
      %156 = vmatprep.subr.mxu0 0.0
      %157 = vmatpush2.msra.mxu0 0.0
      %158 = vmatprep.mubr.f32.mxu0 0.0
      %159 = vmatmul.mubr.f32.gmra.mxu0 %v92
      %v160 = vpop.f32.mrf.mxu0
      %v161 = vadd.f32 %v89, %v160
      %v162 = vpop.f32.mrf.mxu0
      %163 = vdwg.mxu0
      %164 = vst [vmem:[#allocation8] sm:$0x3] %v161
    $region29: #{tpu_custom_call.1} parent=1 // pred_fallthru
      _
    // Predicated region
    $region30: #{tpu_custom_call.1} parent=1 // pred_check
      _
    $region31: #{tpu_custom_call.1} parent=1 // pred_check_branch
      %166 = sbr.rel (0) target = $region33
    $region32: #{tpu_custom_call.1} parent=1 // pred_region
      %s168 = ssub.s32 32, 32
      %169 = vsyncadd [#allocation5], %s168
      %s171 = sshll.u32 [#allocation8], 4
      %s172 = int_to_ptr.vmem [resolvable:$true] %s171
      %174 = dma.vmem_to_hbm [thread:$0]  %s172, 32, %s3, [#allocation5]
    $region33: #{tpu_custom_call.1} parent=1 // pred_fallthru
      _
    // Predicated region
    $region34: #{tpu_custom_call.1} parent=1 // pred_check
      _
    $region35: #{tpu_custom_call.1} parent=1 // pred_check_branch
      %176 = sbr.rel (0) target = $region37
    $region36: #{tpu_custom_call.1} parent=1 // pred_region
      %177 = dma.done [#allocation5], 32
    $region37: #{tpu_custom_call.1} parent=1 // pred_fallthru
      _
    %178 = vsyncpa [#allocation4], 1
    %179 = vsyncpa [#allocation7], 1
    %180 = vsyncpa [#allocation5], 1

// kernel: tpu_custom_call.1
$region0: #{tpu_custom_call.1}
  #allocation0 [shape = 'u32[]', space=smem, size = 0x4, offset = 0x4, fixed_abs, tag = 'smem constant byte address 0x4 - core index']
  #allocation1 [shape = 'u32[144,128]{1,0:T(1,128)}', space=vmem, size = 0x12000, scoped, tag = 'internal scratch']
  #allocation2 [shape = 'f32[2,32]{1,0:T(2,128)}', space=vmem, size = 0x400, scoped, tag = 'scratch operand']
  %s0 = inlined_call_operand.hbm [shape: f32[2,8,32], index: 0, kind: input, shape index: {}]
  %s1 = inlined_call_operand.hbm [shape: f32[32,128], index: 1, kind: input, shape index: {}]
  %s2 = inlined_call_operand.vmem [shape: f32[1,128], index: 2, kind: input, shape index: {}]
  %s3 = inlined_call_operand.hbm [shape: f32[2,128], index: 3, kind: output, shape index: {}]
  %s4 = sld [smem:[#allocation0]]
  $region38: #{tpu_custom_call.1} parent=0
    _
  %s6 = ssub.s32 1, %s4
  %s7 = scalar_select 0, %s6, %s4
  $region1: #{tpu_custom_call.1} parent=0
    #allocation3 [shape = 'u8[8192]{0}', space=vmem, size = 0x2000, scoped, tag = 'input window, operand 0, single buffered']
    #allocation4 [shape = 's32[1]{0}', space=sflag, size = 0x4, scoped, tag = 'scoped memory for tpu_custom_call.1']
    #allocation5 [shape = 's32[1]{0}', space=sflag, size = 0x4, scoped, tag = 'scoped memory for tpu_custom_call.1']
    #allocation6 [shape = 'u8[16384]{0}', space=vmem, size = 0x4000, scoped, tag = 'input window, operand 1, single buffered']
    #allocation7 [shape = 's32[1]{0}', space=sflag, size = 0x4, scoped, tag = 'scoped memory for tpu_custom_call.1']
    #allocation8 [shape = 'u8[1024]{0}', space=vmem, size = 0x400, scoped, tag = 'output window, operand 0, single buffered']
    %8 = vsyncpa [#allocation4], 0
    %9 = vsyncpa [#allocation7], 0
    %10 = vsyncpa [#allocation5], 0
    // Predicated region
    $region2: #{tpu_custom_call.1} parent=1 // pred_check
      _
    $region3: #{tpu_custom_call.1} parent=1 // pred_check_branch
      %12 = sbr.rel (0) target = $region5
    $region4: #{tpu_custom_call.1} parent=1 // pred_region
      %s14 = ssub.s32 256, 256
      %15 = vsyncadd [#allocation4], %s14
      %s16 = sshll.u32 [#allocation3], 4
      %s17 = int_to_ptr.vmem [resolvable:$true] %s16
      %22 = dma.hbm_to_vmem [thread:$0]  %s0, 256, %s17, [#allocation4], 128, 128, 8
    $region5: #{tpu_custom_call.1} parent=1 // pred_fallthru
      _
    // Predicated region
    $region6: #{tpu_custom_call.1} parent=1 // pred_check
      _
    $region7: #{tpu_custom_call.1} parent=1 // pred_check_branch
      %24 = sbr.rel (0) target = $region9
    $region8: #{tpu_custom_call.1} parent=1 // pred_region
      %s26 = ssub.s32 512, 512
      %27 = vsyncadd [#allocation7], %s26
      %s28 = sshll.u32 [#allocation6], 4
      %s29 = int_to_ptr.vmem [resolvable:$true] %s28
      %34 = dma.hbm_to_vmem [thread:$0]  %s1, 512, %s29, [#allocation7], 128, 128, 8
    $region9: #{tpu_custom_call.1} parent=1 // pred_fallthru
      _
    // Predicated region
    $region10: #{tpu_custom_call.1} parent=1 // pred_check
      _
    $region11: #{tpu_custom_call.1} parent=1 // pred_check_branch
      %36 = sbr.rel (0) target = $region13
    $region12: #{tpu_custom_call.1} parent=1 // pred_region
      _
    $region13: #{tpu_custom_call.1} parent=1 // pred_fallthru
      _
    // Predicated region
    $region14: #{tpu_custom_call.1} parent=1 // pred_check
      _
    $region15: #{tpu_custom_call.1} parent=1 // pred_check_branch
      %38 = sbr.rel (0) target = $region17
    $region16: #{tpu_custom_call.1} parent=1 // pred_region
      %39 = dma.done [#allocation4], 256
    $region17: #{tpu_custom_call.1} parent=1 // pred_fallthru
      _
    // Predicated region
    $region18: #{tpu_custom_call.1} parent=1 // pred_check
      _
    $region19: #{tpu_custom_call.1} parent=1 // pred_check_branch
      %41 = sbr.rel (0) target = $region21
    $region20: #{tpu_custom_call.1} parent=1 // pred_region
      %42 = dma.done [#allocation7], 512
    $region21: #{tpu_custom_call.1} parent=1 // pred_fallthru
      _
    %p43 = scmp.eq.s32.totalorder 0, 0
    // Predicated region
    $region22: #{tpu_custom_call.1} parent=1 // pred_check
      %p44 = pneg %p43
    $region23: #{tpu_custom_call.1} parent=1 // pred_check_branch
      %46 = sbr.rel (%p44) target = $region25
    $region24: #{tpu_custom_call.1} parent=1 // pred_region
      %vm47 = vcmask 254976
      %48 = vst.msk [vmem:[#allocation2] sm:$0x3] %vm47, 0.0
    $region25: #{tpu_custom_call.1} parent=1 // pred_fallthru
      _
    %v49 = vld [vmem:[#allocation3] sm:$0xff]
    %v50 = vld [vmem:[#allocation3 + $0x8] sm:$0xff]
    %v51 = vld [vmem:[#allocation2] sm:$0x3]
    %vm52 = vcmask 261120
    %v53 = vsel %vm52, %v49, 0.0
    %v54 = vrot.slane %v53, 4
    %v55 = vadd.f32 %v53, %v54
    %v56 = vrot.slane %v55, 2
    %v57 = vadd.f32 %v55, %v56
    %v58 = vrot.slane %v57, 1
    %v59 = vadd.f32 %v57, %v58
    %v60 = vsel %vm52, %v50, 0.0
    %v61 = vrot.slane %v60, 4
    %v62 = vadd.f32 %v60, %v61
    %v63 = vrot.slane %v62, 2
    %v64 = vadd.f32 %v62, %v63
    %v65 = vrot.slane %v64, 1
    %v66 = vadd.f32 %v64, %v65
    %vm69 = vcmask 1041409
    %v70 = vsel %vm69, %v66, %v59
    %v72 = vadd.f32 %v51, %v70
    %vm73 = vcmask 254976
    %74 = vst.msk [vmem:[#allocation2] sm:$0x3] %vm73, %v72
    // Predicated region
    $region26: #{tpu_custom_call.1} parent=1 // pred_check
      %p75 = pneg %p43
    $region27: #{tpu_custom_call.1} parent=1 // pred_check_branch
      %77 = sbr.rel (%p75) target = $region29
    $region28: #{tpu_custom_call.1} parent=1 // pred_region
      %v78 = vld [vmem:[#allocation2] sm:$0x3]
      %v79 = vld [vmem:[#allocation6] sm:$0xff]
      %v80 = vld [vmem:[#allocation6 + $0x8] sm:$0xff]
      %v81 = vld [vmem:[#allocation6 + $0x10] sm:$0xff]
      %v82 = vld [vmem:[#allocation6 + $0x18] sm:$0xff]
      %v83 = vld [vmem:[%s2] sm:$0x1]
      %v84 = vmul.f32 %v83, 8.0
      %v86 = vlaneseq
      %v87 = vshrl.u32 %v86, 7
      %v88 = vsub.s32 0, %v87
      %v89 = vrot.slane %v84, %v88
      %v92 = vsel %vm52, %v78, 0
      %94 = vmatprep.subr.mxu0 0.0
      %95 = vmatpush1.msra.mxu0 0.0
      %96 = vmatprep.subr.mxu0 0.0
      %97 = vmatpush1.msra.mxu0 0.0
      %98 = vmatprep.subr.mxu0 0.0
      %99 = vmatpush1.msra.mxu0 0.0
      %100 = vmatprep.subr.mxu0 0.0
      %101 = vmatpush1.msra.mxu0 0.0
      %102 = vmatprep.subr.mxu0 0.0
      %103 = vmatpush1.msra.mxu0 0.0
      %104 = vmatprep.subr.mxu0 0.0
      %105 = vmatpush1.msra.mxu0 0.0
      %106 = vmatprep.subr.mxu0 0.0
      %107 = vmatpush1.msra.mxu0 0.0
      %108 = vmatprep.subr.mxu0 0.0
      %109 = vmatpush1.msra.mxu0 0.0
      %110 = vmatprep.subr.mxu0 0.0
      %111 = vmatpush1.msra.mxu0 0.0
      %112 = vmatprep.subr.mxu0 0.0
      %113 = vmatpush1.msra.mxu0 0.0
      %114 = vmatprep.subr.mxu0 0.0
      %115 = vmatpush1.msra.mxu0 0.0
      %116 = vmatprep.subr.mxu0 0.0
      %117 = vmatpush1.msra.mxu0 0.0
      %118 = vmatprep.subr.mxu0 0.0
      %119 = vmatpush1.msra.mxu0 %v82
      %120 = vmatprep.subr.mxu0 0.0
      %121 = vmatpush1.msra.mxu0 %v81
      %122 = vmatprep.subr.mxu0 0.0
      %123 = vmatpush1.msra.mxu0 %v80
      %124 = vmatprep.subr.mxu0 0.0
      %125 = vmatpush1.msra.mxu0 %v79
      %126 = vmatprep.subr.mxu0 0.0
      %127 = vmatpush2.msra.mxu0 0.0
      %128 = vmatprep.subr.mxu0 0.0
      %129 = vmatpush2.msra.mxu0 0.0
      %130 = vmatprep.subr.mxu0 0.0
      %131 = vmatpush2.msra.mxu0 0.0
      %132 = vmatprep.subr.mxu0 0.0
      %133 = vmatpush2.msra.mxu0 0.0
      %134 = vmatprep.subr.mxu0 0.0
      %135 = vmatpush2.msra.mxu0 0.0
      %136 = vmatprep.subr.mxu0 0.0
      %137 = vmatpush2.msra.mxu0 0.0
      %138 = vmatprep.subr.mxu0 0.0
      %139 = vmatpush2.msra.mxu0 0.0
      %140 = vmatprep.subr.mxu0 0.0
      %141 = vmatpush2.msra.mxu0 0.0
      %142 = vmatprep.subr.mxu0 0.0
      %143 = vmatpush2.msra.mxu0 0.0
      %144 = vmatprep.subr.mxu0 0.0
      %145 = vmatpush2.msra.mxu0 0.0
      %146 = vmatprep.subr.mxu0 0.0
      %147 = vmatpush2.msra.mxu0 0.0
      %148 = vmatprep.subr.mxu0 0.0
      %149 = vmatpush2.msra.mxu0 0.0
      %150 = vmatprep.subr.mxu0 0.0
      %151 = vmatpush2.msra.mxu0 0.0
      %152 = vmatprep.subr.mxu0 0.0
      %153 = vmatpush2.msra.mxu0 0.0
      %154 = vmatprep.subr.mxu0 0.0
      %155 = vmatpush2.msra.mxu0 0.0
      %156 = vmatprep.subr.mxu0 0.0
      %157 = vmatpush2.msra.mxu0 0.0
      %158 = vmatprep.mubr.f32.mxu0 0.0
      %159 = vmatmul.mubr.f32.gmra.mxu0 %v92
      %v160 = vpop.f32.mrf.mxu0
      %v161 = vadd.f32 %v89, %v160
      %v162 = vpop.f32.mrf.mxu0
      %163 = vdwg.mxu0
      %164 = vst [vmem:[#allocation8] sm:$0x3] %v161
    $region29: #{tpu_custom_call.1} parent=1 // pred_fallthru
      _
    // Predicated region
    $region30: #{tpu_custom_call.1} parent=1 // pred_check
      _
    $region31: #{tpu_custom_call.1} parent=1 // pred_check_branch
      %166 = sbr.rel (0) target = $region33
    $region32: #{tpu_custom_call.1} parent=1 // pred_region
      %s168 = ssub.s32 32, 32
      %169 = vsyncadd [#allocation5], %s168
      %s171 = sshll.u32 [#allocation8], 4
      %s172 = int_to_ptr.vmem [resolvable:$true] %s171
      %174 = dma.vmem_to_hbm [thread:$0]  %s172, 32, %s3, [#allocation5]
    $region33: #{tpu_custom_call.1} parent=1 // pred_fallthru
      _
    // Predicated region
    $region34: #{tpu_custom_call.1} parent=1 // pred_check
      _
    $region35: #{tpu_custom_call.1} parent=1 // pred_check_branch
      %176 = sbr.rel (0) target = $region37
    $region36: #{tpu_custom_call.1} parent=1 // pred_region
      %177 = dma.done [#allocation5], 32
    $region37: #{tpu_custom_call.1} parent=1 // pred_fallthru
      _
    %178 = vsyncpa [#allocation4], 1
    %179 = vsyncpa [#allocation7], 1
    %180 = vsyncpa [#allocation5], 1

</llo_original>
